<compile_context>
chip_gen: v6e
topology: v6e:2x2x1
jax: 0.10.0
libtpu: 0.0.40
codegen_flags: <defaults>
</compile_context>

<pallas_src>
import functools

import jax
import jax.numpy as jnp
from jax import lax
from jax.experimental import pallas as pl
from jax.experimental.pallas import tpu as pltpu


# ----------------------------------------------------------------------------
# Bilinear x2 upsample, align_corners=True (matches torch).
# ----------------------------------------------------------------------------
def _interp_matrix(n_out, n_in, dtype=jnp.float32):
    """(n_out, n_in) row-stochastic matrix implementing 1-D align_corners interp."""
    if n_in == 1:
        return jnp.ones((n_out, 1), dtype)
    src = jnp.linspace(0.0, n_in - 1.0, n_out)
    i0 = jnp.clip(jnp.floor(src).astype(jnp.int32), 0, n_in - 2)
    frac = (src - i0.astype(src.dtype)).astype(dtype)
    lo = jax.nn.one_hot(i0, n_in, dtype=dtype)
    hi = jax.nn.one_hot(i0 + 1, n_in, dtype=dtype)
    return lo * (1.0 - frac)[:, None] + hi * frac[:, None]


def upsample_bilinear_x2_align_corners(x):
    # Gather-based upsample (torch-equivalent). Used by the pure-JAX reference
    # only; the optimized path uses the in-kernel matmul interpolation.
    B, C, h, w = x.shape
    H, W = 2 * h, 2 * w
    ys = jnp.linspace(0.0, h - 1.0, H)
    xs = jnp.linspace(0.0, w - 1.0, W)
    y0 = jnp.floor(ys).astype(jnp.int32)
    x0 = jnp.floor(xs).astype(jnp.int32)
    y1 = jnp.clip(y0 + 1, 0, h - 1)
    x1 = jnp.clip(x0 + 1, 0, w - 1)
    wy = (ys - y0.astype(ys.dtype))[:, None]
    wx = (xs - x0.astype(xs.dtype))[None, :]
    g00 = x[:, :, y0][:, :, :, x0]
    g01 = x[:, :, y0][:, :, :, x1]
    g10 = x[:, :, y1][:, :, :, x0]
    g11 = x[:, :, y1][:, :, :, x1]
    top = g00 * (1.0 - wx) + g01 * wx
    bot = g10 * (1.0 - wx) + g11 * wx
    return top * (1.0 - wy) + bot * wy


def fold_bn(w, gamma, beta, mean, var, eps=1e-5):
    # Fold BatchNorm2d (eval mode) into a preceding bias-free 1x1 conv.
    scale = gamma / jnp.sqrt(var + eps)
    return w * scale[:, None], (beta - mean * scale)[:, None]


# ----------------------------------------------------------------------------
# Pallas kernel: one batch element per grid step. Everything fused:
#   pro conv @ low res -> bilinear x2 (matmul) -> prompt conv -> channel attn
#   -> softmax -> fused (A+I)(q+det) apply folded into the local conv -> ReLU.
# ----------------------------------------------------------------------------
def _caf_kernel(sal_ref, det_ref, p1_ref, p2_ref, ut_ref,
                w_pro_ref, b_pro_ref, w_prm_ref, b_prm_ref,
                w_loc_ref, b_loc_ref, out_ref,
                *, n_true, mxu_dt, vpu_dt, exact_recip):
    f32 = jnp.float32

    # ---- pro: 1x1 conv (BN folded) at LOW res, then bilinear x2 as a matmul.
    # Exact commutation: both ops are linear and the interp rows sum to 1, so
    # the folded bias passes through the upsample unchanged.
    q_low = jnp.dot(w_pro_ref[...], sal_ref[...],
                    preferred_element_type=f32) + b_pro_ref[...]        # (C, n_low) f32
    q = jnp.dot(q_low.astype(mxu_dt), ut_ref[...],
                preferred_element_type=f32)                             # (C, N) f32

    # ---- prompt: (det + p1 + p2) -> 1x1 conv + BN (folded), no act.
    det = det_ref[...]                                                  # (C, N) act dt
    dsum = (det.astype(vpu_dt) + p1_ref[...].astype(vpu_dt)
            + p2_ref[...].astype(vpu_dt))
    det_k = jnp.dot(w_prm_ref[...], dsum.astype(mxu_dt),
                    preferred_element_type=f32) + b_prm_ref[...]        # (C, N) f32

    # ---- attn = (q @ det_k^T) * N^{-1/2}; contract the lane (N) axis of both.
    attn = lax.dot_general(q.astype(mxu_dt), det_k.astype(mxu_dt),
                           (((1,), (1,)), ((), ())),
                           preferred_element_type=f32) * (float(n_true) ** -0.5)

    # ---- softmax over the flattened (C*C) matrix (view(B, C*C)) — in f32.
    attn = attn - jnp.max(attn)
    e = jnp.exp(attn)
    denom = jnp.sum(e, keepdims=True)                                   # (1, 1)
    if exact_recip:
        a = e / denom
    else:
        a = e * pl.reciprocal(denom, approx=True)                       # (C, C)

    # ---- attn_s + attn_d == (A + I) @ (q + det); fold the local conv:
    #      y = w_loc @ ((A + I) s) + b_loc == (w_loc @ A + w_loc) @ s + b_loc
    s = (q.astype(vpu_dt) + det.astype(vpu_dt)).astype(mxu_dt)          # (C, N)
    w_loc = w_loc_ref[...]
    m = jnp.dot(w_loc, a.astype(mxu_dt),
                preferred_element_type=f32) + w_loc.astype(f32)         # (C, C) tiny
    y = jnp.dot(m.astype(mxu_dt), s,
                preferred_element_type=f32) + b_loc_ref[...]            # (C, N)
    out_ref[...] = jnp.maximum(y, 0.0).astype(out_ref.dtype)            # local ReLU


def caf_forward(saliency, details, p1, p2, params, *, use_bf16=True):
    """saliency: (B, C1, H/2, W/2); details, p1, p2: (B, C, H, W)."""
    B, C, H, W = details.shape
    _, C1, h, w = saliency.shape
    assert (2 * h, 2 * w) == (H, W)
    N = H * W
    n_low = h * w
    # Keep the output lane-dense (unmasked vst): pad N to a multiple of 128.
    N_pad = 128 * pl.cdiv(N, 128)

    w_pro, b_pro = params["pro"]
    w_prm, b_prm = params["prompt"]
    w_loc, b_loc = params["local"]

    act_dt = jnp.bfloat16 if use_bf16 else jnp.float32
    kind = jax.devices()[0].device_kind.lower()
    # v5 has no bf16 VALU path -> do the elementwise adds in f32 there.
    vpu_dt = jnp.float32 if (not use_bf16 or "v5" in kind) else act_dt

    # Separable bilinear x2 (align_corners) as one (n_low, N) operator:
    #   up(x)[H,W] = sum_{h,w} ry[H,h] rx[W,w] x[h,w]  ==  x_flat @ kron(ry,rx)^T
    ry = _interp_matrix(H, h)
    rx = _interp_matrix(W, w)
    u_t = jnp.einsum("Hh,Ww->hwHW", ry, rx).reshape(n_low, N)

    def pad_last(x):
        if N_pad == N:
            return x
        return jnp.pad(x, [(0, 0)] * (x.ndim - 1) + [(0, N_pad - x.shape[-1])])

    sal_flat = saliency.reshape(B, C1, n_low).astype(act_dt)
    det = pad_last(details.reshape(B, C, N)).astype(act_dt)
    p1f = pad_last(p1.reshape(B, C, N)).astype(act_dt)
    p2f = pad_last(p2.reshape(B, C, N)).astype(act_dt)
    u_t_p = pad_last(u_t).astype(act_dt)

    # Generation-aware scoped-VMEM request: double-buffered streamed blocks,
    # resident interp operator + weights, plus the in-kernel f32 temporaries.
    act_bytes = jnp.dtype(act_dt).itemsize
    block_bytes = (
        2 * (C1 * n_low + 3 * C * N_pad) * act_bytes        # double-buffered inputs
        + 2 * C * N_pad * act_bytes                         # double-buffered output
        + n_low * N_pad * act_bytes                         # resident interp operator
        + (C * C1 + 2 * C * C) * act_bytes + 3 * C * 4      # weights / f32 biases
        + 6 * C * N_pad * 4                                 # in-kernel f32 temporaries
    )
    phys_vmem = (64 if "v7" in kind else 128) * 1024 * 1024
    vmem_limit = int(min(phys_vmem - 16 * 1024 * 1024,
                         max(16 * 1024 * 1024, 2 * block_bytes)))

    batched = lambda c, n: pl.BlockSpec((pl.Squeezed(), c, n), lambda b: (b, 0, 0))
    shared = lambda r, c: pl.BlockSpec((r, c), lambda b: (0, 0))

    kernel = functools.partial(_caf_kernel, n_true=N, mxu_dt=act_dt,
                               vpu_dt=vpu_dt, exact_recip=not use_bf16)

    out = pl.pallas_call(
        kernel,
        out_shape=jax.ShapeDtypeStruct((B, C, N_pad), act_dt),
        grid_spec=pltpu.PrefetchScalarGridSpec(
            num_scalar_prefetch=0,
            grid=(B,),
            in_specs=[
                batched(C1, n_low),             # saliency (low res, pre-pro)
                batched(C, N_pad),              # details
                batched(C, N_pad),              # p1
                batched(C, N_pad),              # p2
                shared(n_low, N_pad),           # bilinear-x2 operator (resident)
                shared(C, C1), shared(C, 1),    # pro    w, b (BN folded)
                shared(C, C),  shared(C, 1),    # prompt w, b (BN folded)
                shared(C, C),  shared(C, 1),    # local  w, b (BN folded)
            ],
            out_specs=batched(C, N_pad),
        ),
        compiler_params=pltpu.CompilerParams(
            dimension_semantics=("parallel",),
            vmem_limit_bytes=vmem_limit),
    )(sal_flat, det, p1f, p2f, u_t_p,
      w_pro.astype(act_dt), b_pro.astype(jnp.float32),
      w_prm.astype(act_dt), b_prm.astype(jnp.float32),
      w_loc.astype(act_dt), b_loc.astype(jnp.float32))

    if N_pad != N:
        out = out[:, :, :N]
    return out.reshape(B, C, H, W)


# ----------------------------------------------------------------------------
# Pure-JAX reference: original op order (upsample -> conv, two applies,
# separate local conv), full f32, gather-based upsample.
# ----------------------------------------------------------------------------
def caf_reference(saliency, details, p1, p2, params):
    B, C, H, W = details.shape
    N = H * W
    w_pro, b_pro = params["pro"]
    w_prm, b_prm = params["prompt"]
    w_loc, b_loc = params["local"]

    sal_up = upsample_bilinear_x2_align_corners(saliency).reshape(B, -1, N)
    det = details.reshape(B, C, N)

    sal_q = jnp.einsum("oc,bcn->bon", w_pro, sal_up) + b_pro[None]
    det_k = jnp.einsum("oc,bcn->bon", w_prm,
                       det + p1.reshape(B, C, N) + p2.reshape(B, C, N)) + b_prm[None]

    attn = jnp.einsum("bcn,bdn->bcd", sal_q, det_k) * (N ** -0.5)
    attn = jax.nn.softmax(attn.reshape(B, C * C), axis=-1).reshape(B, C, C)

    attn_s = jnp.einsum("bcd,bdn->bcn", attn, sal_q) + sal_q
    attn_d = jnp.einsum("bcd,bdn->bcn", attn, det) + det
    x = attn_s + attn_d
    y = jnp.einsum("oc,bcn->bon", w_loc, x) + b_loc[None]
    return jnp.maximum(y, 0.0).reshape(B, C, H, W)


# ----------------------------------------------------------------------------
def make_params(key, c1, c2):
    def conv_bn(k, cin, cout):
        kw, kg, kb, km, kv = jax.random.split(k, 5)
        w = jax.random.normal(kw, (cout, cin), jnp.float32) * 0.1
        gamma = 1.0 + 0.05 * jax.random.normal(kg, (cout,), jnp.float32)
        beta = 0.05 * jax.random.normal(kb, (cout,), jnp.float32)
        mean = 0.05 * jax.random.normal(km, (cout,), jnp.float32)
        var = 1.0 + 0.1 * jax.nn.softplus(jax.random.normal(kv, (cout,), jnp.float32))
        return fold_bn(w, gamma, beta, mean, var)

    k_pro, k_prm, k_loc = jax.random.split(key, 3)
    return {
        "pro": conv_bn(k_pro, c1, c2),
        "prompt": conv_bn(k_prm, c2, c2),
        "local": conv_bn(k_loc, c2, c2),
    }


if __name__ == "__main__":
    key = jax.random.PRNGKey(0)
    k_s, k_d, k_p1, k_p2, k_w = jax.random.split(key, 5)

    B, C1, C2, H, W = 2, 16, 8, 16, 16            # saliency enters at H/2 x W/2
    saliency = jax.random.normal(k_s, (B, C1, H // 2, W // 2), jnp.float32)
    details = jax.random.normal(k_d, (B, C2, H, W), jnp.float32)
    p1 = jax.random.normal(k_p1, (B, C2, H, W), jnp.float32)
    p2 = jax.random.normal(k_p2, (B, C2, H, W), jnp.float32)

    params = make_params(k_w, C1, C2)

    ref = jax.block_until_ready(caf_reference(saliency, details, p1, p2, params))

    # f32 data path: tightly validates the algebraic fusions, commuted conv and
    # the in-kernel matmul upsample (exact softmax reciprocal on this path).
    out_f32 = jax.block_until_ready(
        caf_forward(saliency, details, p1, p2, params, use_bf16=False))
    assert out_f32.shape == (B, C2, H, W), out_f32.shape
    assert out_f32.dtype == jnp.float32
    err_f32 = float(jnp.max(jnp.abs(out_f32 - ref)))
    assert jnp.allclose(out_f32, ref, rtol=1e-4, atol=1e-4), err_f32

    # bf16 fast path (default): bf16 MXU operands / bf16 output / f32 softmax.
    out_bf16 = jax.block_until_ready(
        caf_forward(saliency, details, p1, p2, params, use_bf16=True))
    assert out_bf16.shape == (B, C2, H, W), out_bf16.shape
    assert out_bf16.dtype == jnp.bfloat16
    err_bf16 = float(jnp.max(jnp.abs(out_bf16.astype(jnp.float32) - ref)))
    assert err_bf16 < 1e-1, err_bf16

    print("KERNEL_OK")
</pallas_src>

<mosaic_0001>
module attributes {stable_mosaic.version = 11 : i64} {
  func.func @_caf_kernel(%arg0: i32, %arg1: memref<1x16x64xf32, #tpu.memory_space<vmem>>, %arg2: memref<1x8x256xf32, #tpu.memory_space<vmem>>, %arg3: memref<1x8x256xf32, #tpu.memory_space<vmem>>, %arg4: memref<1x8x256xf32, #tpu.memory_space<vmem>>, %arg5: memref<64x256xf32, #tpu.memory_space<vmem>>, %arg6: memref<8x16xf32, #tpu.memory_space<vmem>>, %arg7: memref<8x1xf32, #tpu.memory_space<vmem>>, %arg8: memref<8x8xf32, #tpu.memory_space<vmem>>, %arg9: memref<8x1xf32, #tpu.memory_space<vmem>>, %arg10: memref<8x8xf32, #tpu.memory_space<vmem>>, %arg11: memref<8x1xf32, #tpu.memory_space<vmem>>, %arg12: memref<1x8x256xf32, #tpu.memory_space<vmem>>) attributes {dimension_semantics = [#tpu.dimension_semantics<parallel>], iteration_bounds = array<i64: 2>, scalar_prefetch = 0 : i64, scratch_operands = 0 : i64, tpu.core_type = #tpu.core_type<tc>, window_params = [{transform_indices = @transform_0, window_bounds = array<i64: 1, 16, 64>}, {transform_indices = @transform_1, window_bounds = array<i64: 1, 8, 256>}, {transform_indices = @transform_2, window_bounds = array<i64: 1, 8, 256>}, {transform_indices = @transform_3, window_bounds = array<i64: 1, 8, 256>}, {pipeline_mode = #tpu.pipeline_mode<synchronous>, transform_indices = @transform_4, window_bounds = array<i64: 64, 256>}, {pipeline_mode = #tpu.pipeline_mode<synchronous>, transform_indices = @transform_5, window_bounds = array<i64: 8, 16>}, {pipeline_mode = #tpu.pipeline_mode<synchronous>, transform_indices = @transform_6, window_bounds = array<i64: 8, 1>}, {pipeline_mode = #tpu.pipeline_mode<synchronous>, transform_indices = @transform_7, window_bounds = array<i64: 8, 8>}, {pipeline_mode = #tpu.pipeline_mode<synchronous>, transform_indices = @transform_8, window_bounds = array<i64: 8, 1>}, {pipeline_mode = #tpu.pipeline_mode<synchronous>, transform_indices = @transform_9, window_bounds = array<i64: 8, 8>}, {pipeline_mode = #tpu.pipeline_mode<synchronous>, transform_indices = @transform_10, window_bounds = array<i64: 8, 1>}, {transform_indices = @transform_11, window_bounds = array<i64: 1, 8, 256>}]} {
    %c0 = arith.constant 0 : index
    %c0_0 = arith.constant 0 : index
    %0 = vector.load %arg6[%c0, %c0_0] : memref<8x16xf32, #tpu.memory_space<vmem>>, vector<8x16xf32>
    %c0_1 = arith.constant 0 : index
    %c0_2 = arith.constant 0 : index
    %c0_3 = arith.constant 0 : index
    %1 = vector.load %arg1[%c0_1, %c0_2, %c0_3] : memref<1x16x64xf32, #tpu.memory_space<vmem>>, vector<1x16x64xf32>
    %2 = vector.shape_cast %1 : vector<1x16x64xf32> to vector<16x64xf32>
    %cst = arith.constant dense<0.000000e+00> : vector<8x64xf32>
    %3 = tpu.matmul %0, %2, %cst {dimension_numbers = #tpu.dot_dimension_numbers<[1], [0], [0], [1], [0, 0, 1, 1], [], []>} : vector<8x16xf32>, vector<16x64xf32>, vector<8x64xf32> -> vector<8x64xf32>
    %c0_4 = arith.constant 0 : index
    %c0_5 = arith.constant 0 : index
    %4 = vector.load %arg7[%c0_4, %c0_5] : memref<8x1xf32, #tpu.memory_space<vmem>>, vector<8x1xf32>
    %5 = vector.broadcast %4 : vector<8x1xf32> to vector<8x64xf32>
    %6 = arith.addf %3, %5 : vector<8x64xf32>
    %c0_6 = arith.constant 0 : index
    %c0_7 = arith.constant 0 : index
    %7 = vector.load %arg5[%c0_6, %c0_7] : memref<64x256xf32, #tpu.memory_space<vmem>>, vector<64x256xf32>
    %cst_8 = arith.constant dense<0.000000e+00> : vector<8x256xf32>
    %8 = tpu.matmul %6, %7, %cst_8 {dimension_numbers = #tpu.dot_dimension_numbers<[1], [0], [0], [1], [0, 0, 1, 1], [], []>} : vector<8x64xf32>, vector<64x256xf32>, vector<8x256xf32> -> vector<8x256xf32>
    %c0_9 = arith.constant 0 : index
    %c0_10 = arith.constant 0 : index
    %c0_11 = arith.constant 0 : index
    %9 = vector.load %arg2[%c0_9, %c0_10, %c0_11] : memref<1x8x256xf32, #tpu.memory_space<vmem>>, vector<1x8x256xf32>
    %10 = vector.shape_cast %9 : vector<1x8x256xf32> to vector<8x256xf32>
    %c0_12 = arith.constant 0 : index
    %c0_13 = arith.constant 0 : index
    %c0_14 = arith.constant 0 : index
    %11 = vector.load %arg3[%c0_12, %c0_13, %c0_14] : memref<1x8x256xf32, #tpu.memory_space<vmem>>, vector<1x8x256xf32>
    %12 = vector.shape_cast %11 : vector<1x8x256xf32> to vector<8x256xf32>
    %13 = arith.addf %10, %12 : vector<8x256xf32>
    %c0_15 = arith.constant 0 : index
    %c0_16 = arith.constant 0 : index
    %c0_17 = arith.constant 0 : index
    %14 = vector.load %arg4[%c0_15, %c0_16, %c0_17] : memref<1x8x256xf32, #tpu.memory_space<vmem>>, vector<1x8x256xf32>
    %15 = vector.shape_cast %14 : vector<1x8x256xf32> to vector<8x256xf32>
    %16 = arith.addf %13, %15 : vector<8x256xf32>
    %c0_18 = arith.constant 0 : index
    %c0_19 = arith.constant 0 : index
    %17 = vector.load %arg8[%c0_18, %c0_19] : memref<8x8xf32, #tpu.memory_space<vmem>>, vector<8x8xf32>
    %cst_20 = arith.constant dense<0.000000e+00> : vector<8x256xf32>
    %18 = tpu.matmul %17, %16, %cst_20 {dimension_numbers = #tpu.dot_dimension_numbers<[1], [0], [0], [1], [0, 0, 1, 1], [], []>} : vector<8x8xf32>, vector<8x256xf32>, vector<8x256xf32> -> vector<8x256xf32>
    %c0_21 = arith.constant 0 : index
    %c0_22 = arith.constant 0 : index
    %19 = vector.load %arg9[%c0_21, %c0_22] : memref<8x1xf32, #tpu.memory_space<vmem>>, vector<8x1xf32>
    %20 = vector.broadcast %19 : vector<8x1xf32> to vector<8x256xf32>
    %21 = arith.addf %18, %20 : vector<8x256xf32>
    %cst_23 = arith.constant dense<0.000000e+00> : vector<8x8xf32>
    %22 = tpu.matmul %8, %21, %cst_23 {dimension_numbers = #tpu.dot_dimension_numbers<[1], [1], [0], [0], [0, 0, 1, 0], [], []>} : vector<8x256xf32>, vector<8x256xf32>, vector<8x8xf32> -> vector<8x8xf32>
    %cst_24 = arith.constant 6.250000e-02 : f32
    %23 = vector.broadcast %cst_24 : f32 to vector<8x8xf32>
    %24 = arith.mulf %22, %23 : vector<8x8xf32>
    %25 = vector.shape_cast %24 : vector<8x8xf32> to vector<1x8x8xf32>
    %cst_25 = arith.constant dense<0xFF800000> : vector<1xf32>
    %26 = vector.multi_reduction <maximumf>, %25, %cst_25 [1, 2] : vector<1x8x8xf32> to vector<1xf32>
    %27 = vector.shape_cast %26 : vector<1xf32> to vector<1x1x1xf32>
    %28 = vector.extract %27[0, 0, 0] : f32 from vector<1x1x1xf32>
    %29 = vector.broadcast %28 : f32 to vector<8x8xf32>
    %30 = arith.subf %24, %29 : vector<8x8xf32>
    %31 = math.exp %30 : vector<8x8xf32>
    %32 = vector.shape_cast %31 : vector<8x8xf32> to vector<1x8x8xf32>
    %cst_26 = arith.constant dense<0.000000e+00> : vector<1xf32>
    %33 = vector.multi_reduction <add>, %32, %cst_26 [1, 2] : vector<1x8x8xf32> to vector<1xf32>
    %34 = vector.shape_cast %33 : vector<1xf32> to vector<1x1x1xf32>
    %35 = vector.extract %34[0, 0, 0] : f32 from vector<1x1x1xf32>
    %36 = vector.broadcast %35 : f32 to vector<1x1xf32>
    %37 = vector.broadcast %36 : vector<1x1xf32> to vector<8x8xf32>
    %38 = arith.divf %31, %37 : vector<8x8xf32>
    %39 = arith.addf %8, %10 : vector<8x256xf32>
    %c0_27 = arith.constant 0 : index
    %c0_28 = arith.constant 0 : index
    %40 = vector.load %arg10[%c0_27, %c0_28] : memref<8x8xf32, #tpu.memory_space<vmem>>, vector<8x8xf32>
    %cst_29 = arith.constant dense<0.000000e+00> : vector<8x8xf32>
    %41 = tpu.matmul %40, %38, %cst_29 {dimension_numbers = #tpu.dot_dimension_numbers<[1], [0], [0], [1], [0, 0, 1, 1], [], []>} : vector<8x8xf32>, vector<8x8xf32>, vector<8x8xf32> -> vector<8x8xf32>
    %42 = arith.addf %41, %40 : vector<8x8xf32>
    %cst_30 = arith.constant dense<0.000000e+00> : vector<8x256xf32>
    %43 = tpu.matmul %42, %39, %cst_30 {dimension_numbers = #tpu.dot_dimension_numbers<[1], [0], [0], [1], [0, 0, 1, 1], [], []>} : vector<8x8xf32>, vector<8x256xf32>, vector<8x256xf32> -> vector<8x256xf32>
    %c0_31 = arith.constant 0 : index
    %c0_32 = arith.constant 0 : index
    %44 = vector.load %arg11[%c0_31, %c0_32] : memref<8x1xf32, #tpu.memory_space<vmem>>, vector<8x1xf32>
    %45 = vector.broadcast %44 : vector<8x1xf32> to vector<8x256xf32>
    %46 = arith.addf %43, %45 : vector<8x256xf32>
    %cst_33 = arith.constant 0.000000e+00 : f32
    %47 = vector.broadcast %cst_33 : f32 to vector<8x256xf32>
    %48 = arith.maximumf %46, %47 : vector<8x256xf32>
    %c0_34 = arith.constant 0 : index
    %c0_35 = arith.constant 0 : index
    %c0_36 = arith.constant 0 : index
    %49 = vector.load %arg12[%c0_34, %c0_35, %c0_36] : memref<1x8x256xf32, #tpu.memory_space<vmem>>, vector<1x8x256xf32>
    %50 = vector.shape_cast %49 : vector<1x8x256xf32> to vector<8x256xf32>
    %51 = vector.shape_cast %48 : vector<8x256xf32> to vector<1x8x256xf32>
    tpu.vector_store %arg12[%c0_34, %c0_35, %c0_36], %51 {strides = array<i32>} : memref<1x8x256xf32, #tpu.memory_space<vmem>>, vector<1x8x256xf32>,
    return
  }
  func.func @transform_0(%arg0: i32) -> (i32, i32, i32) {
    %c0_i32 = arith.constant 0 : i32
    %c0_i32_0 = arith.constant 0 : i32
    %c0_i32_1 = arith.constant 0 : i32
    return %arg0, %c0_i32, %c0_i32_0 : i32, i32, i32
  }
  func.func @transform_1(%arg0: i32) -> (i32, i32, i32) {
    %c0_i32 = arith.constant 0 : i32
    %c0_i32_0 = arith.constant 0 : i32
    %c0_i32_1 = arith.constant 0 : i32
    return %arg0, %c0_i32, %c0_i32_0 : i32, i32, i32
  }
  func.func @transform_2(%arg0: i32) -> (i32, i32, i32) {
    %c0_i32 = arith.constant 0 : i32
    %c0_i32_0 = arith.constant 0 : i32
    %c0_i32_1 = arith.constant 0 : i32
    return %arg0, %c0_i32, %c0_i32_0 : i32, i32, i32
  }
  func.func @transform_3(%arg0: i32) -> (i32, i32, i32) {
    %c0_i32 = arith.constant 0 : i32
    %c0_i32_0 = arith.constant 0 : i32
    %c0_i32_1 = arith.constant 0 : i32
    return %arg0, %c0_i32, %c0_i32_0 : i32, i32, i32
  }
  func.func @transform_4(%arg0: i32) -> (i32, i32) {
    %c0_i32 = arith.constant 0 : i32
    %c0_i32_0 = arith.constant 0 : i32
    %c0_i32_1 = arith.constant 0 : i32
    return %c0_i32, %c0_i32_0 : i32, i32
  }
  func.func @transform_5(%arg0: i32) -> (i32, i32) {
    %c0_i32 = arith.constant 0 : i32
    %c0_i32_0 = arith.constant 0 : i32
    %c0_i32_1 = arith.constant 0 : i32
    return %c0_i32, %c0_i32_0 : i32, i32
  }
  func.func @transform_6(%arg0: i32) -> (i32, i32) {
    %c0_i32 = arith.constant 0 : i32
    %c0_i32_0 = arith.constant 0 : i32
    %c0_i32_1 = arith.constant 0 : i32
    return %c0_i32, %c0_i32_0 : i32, i32
  }
  func.func @transform_7(%arg0: i32) -> (i32, i32) {
    %c0_i32 = arith.constant 0 : i32
    %c0_i32_0 = arith.constant 0 : i32
    %c0_i32_1 = arith.constant 0 : i32
    return %c0_i32, %c0_i32_0 : i32, i32
  }
  func.func @transform_8(%arg0: i32) -> (i32, i32) {
    %c0_i32 = arith.constant 0 : i32
    %c0_i32_0 = arith.constant 0 : i32
    %c0_i32_1 = arith.constant 0 : i32
    return %c0_i32, %c0_i32_0 : i32, i32
  }
  func.func @transform_9(%arg0: i32) -> (i32, i32) {
    %c0_i32 = arith.constant 0 : i32
    %c0_i32_0 = arith.constant 0 : i32
    %c0_i32_1 = arith.constant 0 : i32
    return %c0_i32, %c0_i32_0 : i32, i32
  }
  func.func @transform_10(%arg0: i32) -> (i32, i32) {
    %c0_i32 = arith.constant 0 : i32
    %c0_i32_0 = arith.constant 0 : i32
    %c0_i32_1 = arith.constant 0 : i32
    return %c0_i32, %c0_i32_0 : i32, i32
  }
  func.func @transform_11(%arg0: i32) -> (i32, i32, i32) {
    %c0_i32 = arith.constant 0 : i32
    %c0_i32_0 = arith.constant 0 : i32
    %c0_i32_1 = arith.constant 0 : i32
    return %arg0, %c0_i32, %c0_i32_0 : i32, i32, i32
  }
}

</mosaic_0001>

<llo_original>
// kernel: tpu_custom_call.1
$region0: #{tpu_custom_call.1}
  #allocation0 [shape = 'u32[]', space=smem, size = 0x4, offset = 0x4, fixed_abs, tag = 'smem constant byte address 0x4 - core index']
  #allocation1 [shape = 'u32[144,128]{1,0:T(1,128)}', space=vmem, size = 0x12000, scoped, tag = 'internal scratch']
  %s0 = inlined_call_operand.hbm [shape: f32[2,16,64], index: 0, kind: input, shape index: {}]
  %s1 = inlined_call_operand.hbm [shape: f32[2,8,256], index: 1, kind: input, shape index: {}]
  %s2 = inlined_call_operand.hbm [shape: f32[2,8,256], index: 2, kind: input, shape index: {}]
  %s3 = inlined_call_operand.vmem [shape: f32[2,8,256], index: 3, kind: input, shape index: {}]
  %s4 = inlined_call_operand.hbm [shape: f32[64,256], index: 4, kind: input, shape index: {}]
  %s5 = inlined_call_operand.hbm [shape: f32[8,16], index: 5, kind: input, shape index: {}]
  %s6 = inlined_call_operand.vmem [shape: f32[8,1], index: 6, kind: input, shape index: {}]
  %s7 = inlined_call_operand.hbm [shape: f32[8,8], index: 7, kind: input, shape index: {}]
  %s8 = inlined_call_operand.vmem [shape: f32[8,1], index: 8, kind: input, shape index: {}]
  %s9 = inlined_call_operand.vmem [shape: f32[8,8], index: 9, kind: input, shape index: {}]
  %s10 = inlined_call_operand.vmem [shape: f32[8,1], index: 10, kind: input, shape index: {}]
  %s11 = inlined_call_operand.hbm [shape: f32[2,8,256], index: 11, kind: output, shape index: {}]
  %s12 = sld [smem:[#allocation0]]
  $region101: #{tpu_custom_call.1} parent=0
    _
  %s14 = ssub.s32 1, %s12
  %s15 = scalar_select 0, %s14, %s12
  $region1: #{tpu_custom_call.1} parent=0
    #allocation2 [shape = 'u8[16384]{0}', space=vmem, size = 0x4000, scoped, tag = 'input window, operand 0']
    #allocation3 [shape = 's32[2]{0}', space=sflag, size = 0x8, scoped, tag = 'scoped memory for tpu_custom_call.1']
    #allocation4 [shape = 's32[2]{0}', space=sflag, size = 0x8, scoped, tag = 'scoped memory for tpu_custom_call.1']
    #allocation5 [shape = 'u8[16384]{0}', space=vmem, size = 0x4000, scoped, tag = 'input window, operand 1']
    #allocation6 [shape = 's32[2]{0}', space=sflag, size = 0x8, scoped, tag = 'scoped memory for tpu_custom_call.1']
    #allocation7 [shape = 'u8[16384]{0}', space=vmem, size = 0x4000, scoped, tag = 'input window, operand 2']
    #allocation8 [shape = 'u8[65536]{0}', space=vmem, size = 0x10000, scoped, tag = 'input window, operand 4, single buffered']
    #allocation9 [shape = 's32[1]{0}', space=sflag, size = 0x4, scoped, tag = 'scoped memory for tpu_custom_call.1']
    #allocation10 [shape = 'u8[4096]{0}', space=vmem, size = 0x1000, scoped, tag = 'input window, operand 5, single buffered']
    #allocation11 [shape = 'u8[4096]{0}', space=vmem, size = 0x1000, scoped, tag = 'input window, operand 7, single buffered']
    #allocation12 [shape = 's32[1]{0}', space=sflag, size = 0x4, scoped, tag = 'scoped memory for tpu_custom_call.1']
    #allocation13 [shape = 'u8[16384]{0}', space=vmem, size = 0x4000, scoped, tag = 'output window, operand 0']
    %16 = vsyncpa [#allocation3], 0
    %s17 = scalar_lea.sflag [#allocation3], 1
    %18 = vsyncpa %s17, 0
    %19 = vsyncpa [#allocation6], 0
    %s20 = scalar_lea.sflag [#allocation6], 1
    %21 = vsyncpa %s20, 0
    %22 = vsyncpa [#allocation9], 0
    %23 = vsyncpa [#allocation12], 0
    %24 = vsyncpa [#allocation4], 0
    %s25 = scalar_lea.sflag [#allocation4], 1
    %26 = vsyncpa %s25, 0
    loop: start=0, step=1, limit=4
    $region2: #{tpu_custom_call.1} parent=1 // loop_pre_header
      _
    $region3: #{tpu_custom_call.1} parent=1 // loop_header
      %s28 = sphi 0, %s32
      %p29 = scmp.ge.s32.totalorder %s28, 4
      %s38 = sphi 0, %s40
      %s41 = sphi 0, %s38
      %s42 = sphi 0, %s41
      %s58 = sphi 0, %s42
      %s64 = sphi 0, %s66
      %s67 = sphi 0, %s64
      %s68 = sphi 0, %s67
      %s84 = sphi 0, %s68
      %s90 = sphi 0, %s92
      %s93 = sphi 0, %s90
      %s94 = sphi 0, %s93
      %s110 = sphi 0, %s94
      %s116 = sphi 0, %s118
      %s119 = sphi 0, %s116
      %s120 = sphi 0, %s119
      %s136 = sphi 0, %s120
      %s140 = sphi 0, %s140
      %s142 = sphi 0, %s140
      %s143 = sphi 0, %s142
      %s157 = sphi 0, %s143
      %s161 = sphi 0, %s161
      %s163 = sphi 0, %s161
      %s164 = sphi 0, %s163
      %s178 = sphi 0, %s164
      %s182 = sphi 0, %s182
      %s184 = sphi 0, %s182
      %s185 = sphi 0, %s184
      %s199 = sphi 0, %s185
      %s203 = sphi 0, %s203
      %s205 = sphi 0, %s203
      %s206 = sphi 0, %s205
      %s220 = sphi 0, %s206
      %s224 = sphi 0, %s224
      %s226 = sphi 0, %s224
      %s227 = sphi 0, %s226
      %s241 = sphi 0, %s227
      %s245 = sphi 0, %s245
      %s247 = sphi 0, %s245
      %s248 = sphi 0, %s247
      %s262 = sphi 0, %s248
      %s266 = sphi 0, %s266
      %s268 = sphi 0, %s266
      %s269 = sphi 0, %s268
      %s283 = sphi 0, %s269
      %s289 = sphi 0, %s291
      %s292 = sphi 0, %s289
      %s293 = sphi 0, %s292
      %s309 = sphi 0, %s293
    $region4: #{tpu_custom_call.1} parent=1 // loop_header_branch
      %31 = sbr.rel (%p29) target = $region8
    $region5: #{tpu_custom_call.1} parent=1 // loop_body
      %s33 = ssub.s32 %s28, 1
      %s34 = ssub.s32 %s28, 2
      %s35 = sadd.s32 %s28, 1
      %s36 = ssub.s32 %s28, %s35
      %p37 = scmp.eq.s32.totalorder %s36, 0
      %s39 = sadd.s32 %s38, 1
      %s40 = scalar_select %p37, %s38, %s39
      %p43 = pneg %p37
      %p44 = scmp.eq.s32.totalorder %s28, 1
      %p45 = por %p43, %p44
      %p46 = scmp.ne.s32.totalorder %s38, %s41
      %p47 = scmp.eq.s32.totalorder %s28, 0
      %p48 = por %p46, %p47
      %p49 = scmp.ne.s32.totalorder %s38, %s41
      %p50 = scmp.eq.s32.totalorder %s33, 1
      %p51 = por %p49, %p50
      %p52 = scmp.ne.s32.totalorder %s41, %s42
      %p53 = scmp.eq.s32.totalorder %s33, 0
      %p54 = por %p52, %p53
      %p55 = scmp.ne.s32.totalorder %s41, %s42
      %p56 = scmp.eq.s32.totalorder %s34, 1
      %p57 = por %p55, %p56
      %p59 = scmp.ne.s32.totalorder %s42, %s58
      %p60 = scmp.eq.s32.totalorder %s34, 0
      %p61 = por %p59, %p60
      %s62 = ssub.s32 %s28, %s35
      %p63 = scmp.eq.s32.totalorder %s62, 0
      %s65 = sadd.s32 %s64, 1
      %s66 = scalar_select %p63, %s64, %s65
      %p69 = pneg %p63
      %p70 = scmp.eq.s32.totalorder %s28, 1
      %p71 = por %p69, %p70
      %p72 = scmp.ne.s32.totalorder %s64, %s67
      %p73 = scmp.eq.s32.totalorder %s28, 0
      %p74 = por %p72, %p73
      %p75 = scmp.ne.s32.totalorder %s64, %s67
      %p76 = scmp.eq.s32.totalorder %s33, 1
      %p77 = por %p75, %p76
      %p78 = scmp.ne.s32.totalorder %s67, %s68
      %p79 = scmp.eq.s32.totalorder %s33, 0
      %p80 = por %p78, %p79
      %p81 = scmp.ne.s32.totalorder %s67, %s68
      %p82 = scmp.eq.s32.totalorder %s34, 1
      %p83 = por %p81, %p82
      %p85 = scmp.ne.s32.totalorder %s68, %s84
      %p86 = scmp.eq.s32.totalorder %s34, 0
      %p87 = por %p85, %p86
      %s88 = ssub.s32 %s28, %s35
      %p89 = scmp.eq.s32.totalorder %s88, 0
      %s91 = sadd.s32 %s90, 1
      %s92 = scalar_select %p89, %s90, %s91
      %p95 = pneg %p89
      %p96 = scmp.eq.s32.totalorder %s28, 1
      %p97 = por %p95, %p96
      %p98 = scmp.ne.s32.totalorder %s90, %s93
      %p99 = scmp.eq.s32.totalorder %s28, 0
      %p100 = por %p98, %p99
      %p101 = scmp.ne.s32.totalorder %s90, %s93
      %p102 = scmp.eq.s32.totalorder %s33, 1
      %p103 = por %p101, %p102
      %p104 = scmp.ne.s32.totalorder %s93, %s94
      %p105 = scmp.eq.s32.totalorder %s33, 0
      %p106 = por %p104, %p105
      %p107 = scmp.ne.s32.totalorder %s93, %s94
      %p108 = scmp.eq.s32.totalorder %s34, 1
      %p109 = por %p107, %p108
      %p111 = scmp.ne.s32.totalorder %s94, %s110
      %p112 = scmp.eq.s32.totalorder %s34, 0
      %p113 = por %p111, %p112
      %s114 = ssub.s32 %s28, %s35
      %p115 = scmp.eq.s32.totalorder %s114, 0
      %s117 = sadd.s32 %s116, 1
      %s118 = scalar_select %p115, %s116, %s117
      %p121 = pneg %p115
      %p122 = scmp.eq.s32.totalorder %s28, 1
      %p123 = por %p121, %p122
      %p124 = scmp.ne.s32.totalorder %s116, %s119
      %p125 = scmp.eq.s32.totalorder %s28, 0
      %p126 = por %p124, %p125
      %p127 = scmp.ne.s32.totalorder %s116, %s119
      %p128 = scmp.eq.s32.totalorder %s33, 1
      %p129 = por %p127, %p128
      %p130 = scmp.ne.s32.totalorder %s119, %s120
      %p131 = scmp.eq.s32.totalorder %s33, 0
      %p132 = por %p130, %p131
      %p133 = scmp.ne.s32.totalorder %s119, %s120
      %p134 = scmp.eq.s32.totalorder %s34, 1
      %p135 = por %p133, %p134
      %p137 = scmp.ne.s32.totalorder %s120, %s136
      %p138 = scmp.eq.s32.totalorder %s34, 0
      %p139 = por %p137, %p138
      %s141 = sadd.s32 %s140, 1
      %p144 = scmp.eq.s32.totalorder %s28, 1
      %p145 = scmp.ne.s32.totalorder %s140, %s142
      %p146 = scmp.eq.s32.totalorder %s28, 0
      %p147 = por %p145, %p146
      %p148 = scmp.ne.s32.totalorder %s140, %s142
      %p149 = scmp.eq.s32.totalorder %s33, 1
      %p150 = por %p148, %p149
      %p151 = scmp.ne.s32.totalorder %s142, %s143
      %p152 = scmp.eq.s32.totalorder %s33, 0
      %p153 = por %p151, %p152
      %p154 = scmp.ne.s32.totalorder %s142, %s143
      %p155 = scmp.eq.s32.totalorder %s34, 1
      %p156 = por %p154, %p155
      %p158 = scmp.ne.s32.totalorder %s143, %s157
      %p159 = scmp.eq.s32.totalorder %s34, 0
      %p160 = por %p158, %p159
      %s162 = sadd.s32 %s161, 1
      %p165 = scmp.eq.s32.totalorder %s28, 1
      %p166 = scmp.ne.s32.totalorder %s161, %s163
      %p167 = scmp.eq.s32.totalorder %s28, 0
      %p168 = por %p166, %p167
      %p169 = scmp.ne.s32.totalorder %s161, %s163
      %p170 = scmp.eq.s32.totalorder %s33, 1
      %p171 = por %p169, %p170
      %p172 = scmp.ne.s32.totalorder %s163, %s164
      %p173 = scmp.eq.s32.totalorder %s33, 0
      %p174 = por %p172, %p173
      %p175 = scmp.ne.s32.totalorder %s163, %s164
      %p176 = scmp.eq.s32.totalorder %s34, 1
      %p177 = por %p175, %p176
      %p179 = scmp.ne.s32.totalorder %s164, %s178
      %p180 = scmp.eq.s32.totalorder %s34, 0
      %p181 = por %p179, %p180
      %s183 = sadd.s32 %s182, 1
      %p186 = scmp.eq.s32.totalorder %s28, 1
      %p187 = scmp.ne.s32.totalorder %s182, %s184
      %p188 = scmp.eq.s32.totalorder %s28, 0
      %p189 = por %p187, %p188
      %p190 = scmp.ne.s32.totalorder %s182, %s184
      %p191 = scmp.eq.s32.totalorder %s33, 1
      %p192 = por %p190, %p191
      %p193 = scmp.ne.s32.totalorder %s184, %s185
      %p194 = scmp.eq.s32.totalorder %s33, 0
      %p195 = por %p193, %p194
      %p196 = scmp.ne.s32.totalorder %s184, %s185
      %p197 = scmp.eq.s32.totalorder %s34, 1
      %p198 = por %p196, %p197
      %p200 = scmp.ne.s32.totalorder %s185, %s199
      %p201 = scmp.eq.s32.totalorder %s34, 0
      %p202 = por %p200, %p201
      %s204 = sadd.s32 %s203, 1
      %p207 = scmp.eq.s32.totalorder %s28, 1
      %p208 = scmp.ne.s32.totalorder %s203, %s205
      %p209 = scmp.eq.s32.totalorder %s28, 0
      %p210 = por %p208, %p209
      %p211 = scmp.ne.s32.totalorder %s203, %s205
      %p212 = scmp.eq.s32.totalorder %s33, 1
      %p213 = por %p211, %p212
      %p214 = scmp.ne.s32.totalorder %s205, %s206
      %p215 = scmp.eq.s32.totalorder %s33, 0
      %p216 = por %p214, %p215
      %p217 = scmp.ne.s32.totalorder %s205, %s206
      %p218 = scmp.eq.s32.totalorder %s34, 1
      %p219 = por %p217, %p218
      %p221 = scmp.ne.s32.totalorder %s206, %s220
      %p222 = scmp.eq.s32.totalorder %s34, 0
      %p223 = por %p221, %p222
      %s225 = sadd.s32 %s224, 1
      %p228 = scmp.eq.s32.totalorder %s28, 1
      %p229 = scmp.ne.s32.totalorder %s224, %s226
      %p230 = scmp.eq.s32.totalorder %s28, 0
      %p231 = por %p229, %p230
      %p232 = scmp.ne.s32.totalorder %s224, %s226
      %p233 = scmp.eq.s32.totalorder %s33, 1
      %p234 = por %p232, %p233
      %p235 = scmp.ne.s32.totalorder %s226, %s227
      %p236 = scmp.eq.s32.totalorder %s33, 0
      %p237 = por %p235, %p236
      %p238 = scmp.ne.s32.totalorder %s226, %s227
      %p239 = scmp.eq.s32.totalorder %s34, 1
      %p240 = por %p238, %p239
      %p242 = scmp.ne.s32.totalorder %s227, %s241
      %p243 = scmp.eq.s32.totalorder %s34, 0
      %p244 = por %p242, %p243
      %s246 = sadd.s32 %s245, 1
      %p249 = scmp.eq.s32.totalorder %s28, 1
      %p250 = scmp.ne.s32.totalorder %s245, %s247
      %p251 = scmp.eq.s32.totalorder %s28, 0
      %p252 = por %p250, %p251
      %p253 = scmp.ne.s32.totalorder %s245, %s247
      %p254 = scmp.eq.s32.totalorder %s33, 1
      %p255 = por %p253, %p254
      %p256 = scmp.ne.s32.totalorder %s247, %s248
      %p257 = scmp.eq.s32.totalorder %s33, 0
      %p258 = por %p256, %p257
      %p259 = scmp.ne.s32.totalorder %s247, %s248
      %p260 = scmp.eq.s32.totalorder %s34, 1
      %p261 = por %p259, %p260
      %p263 = scmp.ne.s32.totalorder %s248, %s262
      %p264 = scmp.eq.s32.totalorder %s34, 0
      %p265 = por %p263, %p264
      %s267 = sadd.s32 %s266, 1
      %p270 = scmp.eq.s32.totalorder %s28, 1
      %p271 = scmp.ne.s32.totalorder %s266, %s268
      %p272 = scmp.eq.s32.totalorder %s28, 0
      %p273 = por %p271, %p272
      %p274 = scmp.ne.s32.totalorder %s266, %s268
      %p275 = scmp.eq.s32.totalorder %s33, 1
      %p276 = por %p274, %p275
      %p277 = scmp.ne.s32.totalorder %s268, %s269
      %p278 = scmp.eq.s32.totalorder %s33, 0
      %p279 = por %p277, %p278
      %p280 = scmp.ne.s32.totalorder %s268, %s269
      %p281 = scmp.eq.s32.totalorder %s34, 1
      %p282 = por %p280, %p281
      %p284 = scmp.ne.s32.totalorder %s269, %s283
      %p285 = scmp.eq.s32.totalorder %s34, 0
      %p286 = por %p284, %p285
      %s287 = ssub.s32 %s28, %s35
      %p288 = scmp.eq.s32.totalorder %s287, 0
      %s290 = sadd.s32 %s289, 1
      %s291 = scalar_select %p288, %s289, %s290
      %p294 = pneg %p288
      %p295 = scmp.eq.s32.totalorder %s28, 1
      %p296 = por %p294, %p295
      %p297 = scmp.ne.s32.totalorder %s289, %s292
      %p298 = scmp.eq.s32.totalorder %s28, 0
      %p299 = por %p297, %p298
      %p300 = scmp.ne.s32.totalorder %s289, %s292
      %p301 = scmp.eq.s32.totalorder %s33, 1
      %p302 = por %p300, %p301
      %p303 = scmp.ne.s32.totalorder %s292, %s293
      %p304 = scmp.eq.s32.totalorder %s33, 0
      %p305 = por %p303, %p304
      %p306 = scmp.ne.s32.totalorder %s292, %s293
      %p307 = scmp.eq.s32.totalorder %s34, 1
      %p308 = por %p306, %p307
      %p310 = scmp.ne.s32.totalorder %s293, %s309
      %p311 = scmp.eq.s32.totalorder %s34, 0
      %p312 = por %p310, %p311
      %p313 = scmp.le.s32.totalorder 1, %s28
      %p314 = scmp.lt.s32.totalorder %s28, 3
      %p315 = pnand %p313, %p314
      %p316 = pneg %p315
      // Predicated region
      $region9: #{tpu_custom_call.1} parent=5 // pred_check
        _
      $region10: #{tpu_custom_call.1} parent=5 // pred_check_branch
        %318 = sbr.rel (%p315) target = $region12
      $region11: #{tpu_custom_call.1} parent=5 // pred_region
        %s319 = ssub.s32 %s28, 1
        // Predicated region
        $region13: #{tpu_custom_call.1} parent=11 // pred_check
          %p320 = pneg %p153
        $region14: #{tpu_custom_call.1} parent=11 // pred_check_branch
          %322 = sbr.rel (%p320) target = $region16
        $region15: #{tpu_custom_call.1} parent=11 // pred_region
          %s324 = ssub.s32 2048, 2048
          %325 = vsyncadd [#allocation9], %s324
          %s326 = sshll.u32 [#allocation8], 4
          %s327 = int_to_ptr.vmem [resolvable:$true] %s326
          %332 = dma.hbm_to_vmem [thread:$0]  %s4, 2048, %s327, [#allocation9], 256, 256, 16
        $region16: #{tpu_custom_call.1} parent=11 // pred_fallthru
          _
        // Predicated region
        $region17: #{tpu_custom_call.1} parent=11 // pred_check
          %p333 = pneg %p174
        $region18: #{tpu_custom_call.1} parent=11 // pred_check_branch
          %335 = sbr.rel (%p333) target = $region20
        $region19: #{tpu_custom_call.1} parent=11 // pred_region
          %s337 = ssub.s32 128, 128
          %338 = vsyncadd [#allocation9], %s337
          %s340 = sshll.u32 [#allocation10], 4
          %s341 = int_to_ptr.vmem [resolvable:$true] %s340
          %343 = dma.hbm_to_vmem [thread:$0]  %s5, 128, %s341, [#allocation9]
        $region20: #{tpu_custom_call.1} parent=11 // pred_fallthru
          _
        // Predicated region
        $region21: #{tpu_custom_call.1} parent=11 // pred_check
          %p344 = pneg %p195
        $region22: #{tpu_custom_call.1} parent=11 // pred_check_branch
          %346 = sbr.rel (%p344) target = $region24
        $region23: #{tpu_custom_call.1} parent=11 // pred_region
          _
        $region24: #{tpu_custom_call.1} parent=11 // pred_fallthru
          _
        // Predicated region
        $region25: #{tpu_custom_call.1} parent=11 // pred_check
          %p347 = pneg %p216
        $region26: #{tpu_custom_call.1} parent=11 // pred_check_branch
          %349 = sbr.rel (%p347) target = $region28
        $region27: #{tpu_custom_call.1} parent=11 // pred_region
          %s351 = ssub.s32 128, 128
          %352 = vsyncadd [#allocation12], %s351
          %s354 = sshll.u32 [#allocation11], 4
          %s355 = int_to_ptr.vmem [resolvable:$true] %s354
          %357 = dma.hbm_to_vmem [thread:$0]  %s7, 128, %s355, [#allocation12]
        $region28: #{tpu_custom_call.1} parent=11 // pred_fallthru
          _
        // Predicated region
        $region29: #{tpu_custom_call.1} parent=11 // pred_check
          %p358 = pneg %p237
        $region30: #{tpu_custom_call.1} parent=11 // pred_check_branch
          %360 = sbr.rel (%p358) target = $region32
        $region31: #{tpu_custom_call.1} parent=11 // pred_region
          _
        $region32: #{tpu_custom_call.1} parent=11 // pred_fallthru
          _
        // Predicated region
        $region33: #{tpu_custom_call.1} parent=11 // pred_check
          %p361 = pneg %p258
        $region34: #{tpu_custom_call.1} parent=11 // pred_check_branch
          %363 = sbr.rel (%p361) target = $region36
        $region35: #{tpu_custom_call.1} parent=11 // pred_region
          _
        $region36: #{tpu_custom_call.1} parent=11 // pred_fallthru
          _
        // Predicated region
        $region37: #{tpu_custom_call.1} parent=11 // pred_check
          %p364 = pneg %p279
        $region38: #{tpu_custom_call.1} parent=11 // pred_check_branch
          %366 = sbr.rel (%p364) target = $region40
        $region39: #{tpu_custom_call.1} parent=11 // pred_region
          _
        $region40: #{tpu_custom_call.1} parent=11 // pred_fallthru
          _
      $region12: #{tpu_custom_call.1} parent=5 // pred_fallthru
        _
      %p367 = scmp.lt.s32.totalorder %s28, 2
      // Predicated region
      $region41: #{tpu_custom_call.1} parent=5 // pred_check
        %p368 = pneg %p367
      $region42: #{tpu_custom_call.1} parent=5 // pred_check_branch
        %370 = sbr.rel (%p368) target = $region44
      $region43: #{tpu_custom_call.1} parent=5 // pred_region
        // Predicated region
        $region45: #{tpu_custom_call.1} parent=43 // pred_check
          %p371 = pneg %p48
        $region46: #{tpu_custom_call.1} parent=43 // pred_check_branch
          %373 = sbr.rel (%p371) target = $region48
        $region47: #{tpu_custom_call.1} parent=43 // pred_region
          %s374 = sand.u32 %s38, 1
          %s375 = scalar_lea.sflag [#allocation3], %s374
          %s376 = sand.u32 %s38, 1
          %s377 = smul.addr %s376, 16
          %s378 = scalar_lea.vmem [#allocation2], %s377
          %s380 = ssub.s32 256, 256
          %381 = vsyncadd %s375, %s380
          %s382 = smul.addr %s28, 2
          %s383 = smul.addr %s382, 128
          %s384 = scalar_lea.hbm %s0, %s383
          %s385 = sshll.u32 %s378, 4
          %s386 = int_to_ptr.vmem [resolvable:$true] %s385
          %391 = dma.hbm_to_vmem [thread:$0]  %s384, 256, %s386, %s375, 128, 128, 8
        $region48: #{tpu_custom_call.1} parent=43 // pred_fallthru
          _
        // Predicated region
        $region49: #{tpu_custom_call.1} parent=43 // pred_check
          %p392 = pneg %p74
        $region50: #{tpu_custom_call.1} parent=43 // pred_check_branch
          %394 = sbr.rel (%p392) target = $region52
        $region51: #{tpu_custom_call.1} parent=43 // pred_region
          %s395 = sand.u32 %s28, 1
          %s396 = scalar_lea.sflag [#allocation6], %s395
          %s397 = sand.u32 %s64, 1
          %s398 = smul.addr %s397, 16
          %s399 = scalar_lea.vmem [#allocation5], %s398
          %s401 = ssub.s32 256, 256
          %402 = vsyncadd %s396, %s401
          %s403 = smul.addr %s28, 2
          %s404 = smul.addr %s403, 128
          %s405 = scalar_lea.hbm %s1, %s404
          %s407 = sshll.u32 %s399, 4
          %s408 = int_to_ptr.vmem [resolvable:$true] %s407
          %410 = dma.hbm_to_vmem [thread:$0]  %s405, 256, %s408, %s396
        $region52: #{tpu_custom_call.1} parent=43 // pred_fallthru
          _
        // Predicated region
        $region53: #{tpu_custom_call.1} parent=43 // pred_check
          %p411 = pneg %p100
        $region54: #{tpu_custom_call.1} parent=43 // pred_check_branch
          %413 = sbr.rel (%p411) target = $region56
        $region55: #{tpu_custom_call.1} parent=43 // pred_region
          %s414 = sand.u32 %s28, 1
          %s415 = scalar_lea.sflag [#allocation6], %s414
          %s416 = sand.u32 %s90, 1
          %s417 = smul.addr %s416, 16
          %s418 = scalar_lea.vmem [#allocation7], %s417
          %s420 = ssub.s32 256, 256
          %421 = vsyncadd %s415, %s420
          %s422 = smul.addr %s28, 2
          %s423 = smul.addr %s422, 128
          %s424 = scalar_lea.hbm %s2, %s423
          %s426 = sshll.u32 %s418, 4
          %s427 = int_to_ptr.vmem [resolvable:$true] %s426
          %429 = dma.hbm_to_vmem [thread:$0]  %s424, 256, %s427, %s415
        $region56: #{tpu_custom_call.1} parent=43 // pred_fallthru
          _
        // Predicated region
        $region57: #{tpu_custom_call.1} parent=43 // pred_check
          %p430 = pneg %p126
        $region58: #{tpu_custom_call.1} parent=43 // pred_check_branch
          %432 = sbr.rel (%p430) target = $region60
        $region59: #{tpu_custom_call.1} parent=43 // pred_region
          %p433 = scmp.lt.s32.totalorder %s28, 1
          %s434 = scalar_select %p433, %s28, 1
          %s435 = smul.addr %s434, 2
          %s436 = smul.addr %s435, 8
          %s437 = scalar_lea.vmem %s3, %s436
        $region60: #{tpu_custom_call.1} parent=43 // pred_fallthru
          _
      $region44: #{tpu_custom_call.1} parent=5 // pred_fallthru
        _
      %p438 = scmp.le.s32.totalorder 1, %s28
      %p439 = scmp.lt.s32.totalorder %s28, 3
      %p440 = pnand %p438, %p439
      %p441 = pneg %p440
      // Predicated region
      $region61: #{tpu_custom_call.1} parent=5 // pred_check
        _
      $region62: #{tpu_custom_call.1} parent=5 // pred_check_branch
        %443 = sbr.rel (%p440) target = $region64
      $region63: #{tpu_custom_call.1} parent=5 // pred_region
        %s444 = ssub.s32 %s28, 1
        %s445 = sand.u32 %s41, 1
        %s446 = scalar_lea.sflag [#allocation3], %s445
        %s447 = sand.u32 %s41, 1
        %s448 = smul.addr %s447, 16
        %s449 = scalar_lea.vmem [#allocation2], %s448
        // Predicated region
        $region65: #{tpu_custom_call.1} parent=63 // pred_check
          %p450 = pneg %p54
        $region66: #{tpu_custom_call.1} parent=63 // pred_check_branch
          %452 = sbr.rel (%p450) target = $region68
        $region67: #{tpu_custom_call.1} parent=63 // pred_region
          %453 = dma.done %s446, 256
        $region68: #{tpu_custom_call.1} parent=63 // pred_fallthru
          _
        %s454 = sand.u32 %s33, 1
        %s455 = scalar_lea.sflag [#allocation6], %s454
        %s456 = sand.u32 %s67, 1
        %s457 = smul.addr %s456, 16
        %s458 = scalar_lea.vmem [#allocation5], %s457
        // Predicated region
        $region69: #{tpu_custom_call.1} parent=63 // pred_check
          %p459 = pneg %p80
        $region70: #{tpu_custom_call.1} parent=63 // pred_check_branch
          %461 = sbr.rel (%p459) target = $region72
        $region71: #{tpu_custom_call.1} parent=63 // pred_region
          %462 = dma.done %s455, 256
        $region72: #{tpu_custom_call.1} parent=63 // pred_fallthru
          _
        %s463 = sand.u32 %s33, 1
        %s464 = scalar_lea.sflag [#allocation6], %s463
        %s465 = sand.u32 %s93, 1
        %s466 = smul.addr %s465, 16
        %s467 = scalar_lea.vmem [#allocation7], %s466
        // Predicated region
        $region73: #{tpu_custom_call.1} parent=63 // pred_check
          %p468 = pneg %p106
        $region74: #{tpu_custom_call.1} parent=63 // pred_check_branch
          %470 = sbr.rel (%p468) target = $region76
        $region75: #{tpu_custom_call.1} parent=63 // pred_region
          %471 = dma.done %s464, 256
        $region76: #{tpu_custom_call.1} parent=63 // pred_fallthru
          _
        // Predicated region
        $region77: #{tpu_custom_call.1} parent=63 // pred_check
          %p472 = pneg %p153
        $region78: #{tpu_custom_call.1} parent=63 // pred_check_branch
          %474 = sbr.rel (%p472) target = $region80
        $region79: #{tpu_custom_call.1} parent=63 // pred_region
          %475 = dma.done [#allocation9], 2048
        $region80: #{tpu_custom_call.1} parent=63 // pred_fallthru
          _
        // Predicated region
        $region81: #{tpu_custom_call.1} parent=63 // pred_check
          %p476 = pneg %p174
        $region82: #{tpu_custom_call.1} parent=63 // pred_check_branch
          %478 = sbr.rel (%p476) target = $region84
        $region83: #{tpu_custom_call.1} parent=63 // pred_region
          %479 = dma.done [#allocation9], 128
        $region84: #{tpu_custom_call.1} parent=63 // pred_fallthru
          _
        // Predicated region
        $region85: #{tpu_custom_call.1} parent=63 // pred_check
          %p480 = pneg %p216
        $region86: #{tpu_custom_call.1} parent=63 // pred_check_branch
          %482 = sbr.rel (%p480) target = $region88
        $region87: #{tpu_custom_call.1} parent=63 // pred_region
          %483 = dma.done [#allocation12], 128
        $region88: #{tpu_custom_call.1} parent=63 // pred_fallthru
          _
        %s484 = sand.u32 %s41, 1
        %s485 = scalar_lea.sflag [#allocation3], %s484
        %s486 = sand.u32 %s41, 1
        %s487 = smul.addr %s486, 16
        %s488 = scalar_lea.vmem [#allocation2], %s487
        %p489 = pneg %p54
        %p490 = pneg %p51
        %s491 = sand.u32 %s33, 1
        %s492 = scalar_lea.sflag [#allocation6], %s491
        %s493 = sand.u32 %s67, 1
        %s494 = smul.addr %s493, 16
        %s495 = scalar_lea.vmem [#allocation5], %s494
        %p496 = pneg %p80
        %p497 = pneg %p77
        %s498 = sand.u32 %s33, 1
        %s499 = scalar_lea.sflag [#allocation6], %s498
        %s500 = sand.u32 %s93, 1
        %s501 = smul.addr %s500, 16
        %s502 = scalar_lea.vmem [#allocation7], %s501
        %p503 = pneg %p106
        %p504 = pneg %p103
        %p505 = scmp.lt.s32.totalorder %s33, 1
        %s506 = scalar_select %p505, %s33, 1
        %s507 = smul.addr %s506, 2
        %s508 = smul.addr %s507, 8
        %s509 = scalar_lea.vmem %s3, %s508
        %p510 = pneg %p132
        %p511 = pneg %p129
        %p512 = pneg %p153
        %p513 = pneg %p150
        %p514 = pneg %p174
        %p515 = pneg %p171
        %p516 = pneg %p195
        %p517 = pneg %p192
        %p518 = pneg %p216
        %p519 = pneg %p213
        %p520 = pneg %p237
        %p521 = pneg %p234
        %p522 = pneg %p258
        %p523 = pneg %p255
        %p524 = pneg %p279
        %p525 = pneg %p276
        %p526 = pneg %p305
        %p527 = pneg %p302
        %s528 = sand.u32 %s292, 1
        %s529 = scalar_lea.sflag [#allocation4], %s528
        %s530 = sand.u32 %s292, 1
        %s531 = smul.addr %s530, 16
        %s532 = scalar_lea.vmem [#allocation13], %s531
        %p533 = scmp.lt.s32.totalorder %s33, 1
        %s534 = scalar_select %p533, %s33, 1
        %s535 = smul.addr %s534, 2
        %s536 = smul.addr %s535, 8
        %s537 = scalar_lea.vmem %s3, %s536
        %v538 = vld [vmem:[#allocation10] sm:$0xff]
        %v539 = vld [vmem:[%s449] sm:$0xff]
        %v540 = vld [vmem:[%s449 + $0x8] sm:$0xff]
        %v541 = vld [vmem:[%s6] sm:$0xff]
        %543 = vset.pattern.permute.xlu0 0
        %544 = vperm.xlu0 %543, %v541
        %v545 = vpop.permute.xlu0 %544
        %vm547 = vcmask 130048
        %v549 = vsel %vm547, %v538, 0
        %551 = vmatprep.subr.mxu0 0.0
        %552 = vmatpush1.msra.mxu0 0.0
        %553 = vmatprep.subr.mxu0 0.0
        %554 = vmatpush1.msra.mxu0 0.0
        %555 = vmatprep.subr.mxu0 0.0
        %556 = vmatpush1.msra.mxu0 0.0
        %557 = vmatprep.subr.mxu0 0.0
        %558 = vmatpush1.msra.mxu0 0.0
        %559 = vmatprep.subr.mxu0 0.0
        %560 = vmatpush1.msra.mxu0 0.0
        %561 = vmatprep.subr.mxu0 0.0
        %562 = vmatpush1.msra.mxu0 0.0
        %563 = vmatprep.subr.mxu0 0.0
        %564 = vmatpush1.msra.mxu0 0.0
        %565 = vmatprep.subr.mxu0 0.0
        %566 = vmatpush1.msra.mxu0 0.0
        %567 = vmatprep.subr.mxu0 0.0
        %568 = vmatpush1.msra.mxu0 0.0
        %569 = vmatprep.subr.mxu0 0.0
        %570 = vmatpush1.msra.mxu0 0.0
        %571 = vmatprep.subr.mxu0 0.0
        %572 = vmatpush1.msra.mxu0 0.0
        %573 = vmatprep.subr.mxu0 0.0
        %574 = vmatpush1.msra.mxu0 0.0
        %575 = vmatprep.subr.mxu0 0.0
        %576 = vmatpush1.msra.mxu0 0.0
        %577 = vmatprep.subr.mxu0 0.0
        %578 = vmatpush1.msra.mxu0 0.0
        %579 = vmatprep.subr.mxu0 0.0
        %580 = vmatpush1.msra.mxu0 %v540
        %581 = vmatprep.subr.mxu0 0.0
        %582 = vmatpush1.msra.mxu0 %v539
        %583 = vmatprep.subr.mxu0 0.0
        %584 = vmatpush2.msra.mxu0 0.0
        %585 = vmatprep.subr.mxu0 0.0
        %586 = vmatpush2.msra.mxu0 0.0
        %587 = vmatprep.subr.mxu0 0.0
        %588 = vmatpush2.msra.mxu0 0.0
        %589 = vmatprep.subr.mxu0 0.0
        %590 = vmatpush2.msra.mxu0 0.0
        %591 = vmatprep.subr.mxu0 0.0
        %592 = vmatpush2.msra.mxu0 0.0
        %593 = vmatprep.subr.mxu0 0.0
        %594 = vmatpush2.msra.mxu0 0.0
        %595 = vmatprep.subr.mxu0 0.0
        %596 = vmatpush2.msra.mxu0 0.0
        %597 = vmatprep.subr.mxu0 0.0
        %598 = vmatpush2.msra.mxu0 0.0
        %599 = vmatprep.subr.mxu0 0.0
        %600 = vmatpush2.msra.mxu0 0.0
        %601 = vmatprep.subr.mxu0 0.0
        %602 = vmatpush2.msra.mxu0 0.0
        %603 = vmatprep.subr.mxu0 0.0
        %604 = vmatpush2.msra.mxu0 0.0
        %605 = vmatprep.subr.mxu0 0.0
        %606 = vmatpush2.msra.mxu0 0.0
        %607 = vmatprep.subr.mxu0 0.0
        %608 = vmatpush2.msra.mxu0 0.0
        %609 = vmatprep.subr.mxu0 0.0
        %610 = vmatpush2.msra.mxu0 0.0
        %611 = vmatprep.subr.mxu0 0.0
        %612 = vmatpush2.msra.mxu0 0.0
        %613 = vmatprep.subr.mxu0 0.0
        %614 = vmatpush2.msra.mxu0 0.0
        %615 = vmatprep.mubr.f32.mxu0 0.0
        %616 = vmatmul.mubr.f32.gmra.mxu0 %v549
        %v617 = vpop.f32.mrf.mxu0
        %v618 = vadd.f32 %v545, %v617
        %v619 = vpop.f32.mrf.mxu0
        %620 = vdwg.mxu0
        %v621 = vld [vmem:[#allocation8] sm:$0xff]
        %v622 = vld [vmem:[#allocation8 + $0x8] sm:$0xff]
        %v623 = vld [vmem:[#allocation8 + $0x10] sm:$0xff]
        %v624 = vld [vmem:[#allocation8 + $0x18] sm:$0xff]
        %v625 = vld [vmem:[#allocation8 + $0x20] sm:$0xff]
        %v626 = vld [vmem:[#allocation8 + $0x28] sm:$0xff]
        %v627 = vld [vmem:[#allocation8 + $0x30] sm:$0xff]
        %v628 = vld [vmem:[#allocation8 + $0x38] sm:$0xff]
        %v629 = vld [vmem:[#allocation8 + $0x40] sm:$0xff]
        %v630 = vld [vmem:[#allocation8 + $0x48] sm:$0xff]
        %v631 = vld [vmem:[#allocation8 + $0x50] sm:$0xff]
        %v632 = vld [vmem:[#allocation8 + $0x58] sm:$0xff]
        %v633 = vld [vmem:[#allocation8 + $0x60] sm:$0xff]
        %v634 = vld [vmem:[#allocation8 + $0x68] sm:$0xff]
        %v635 = vld [vmem:[#allocation8 + $0x70] sm:$0xff]
        %v636 = vld [vmem:[#allocation8 + $0x78] sm:$0xff]
        %vm637 = vcmask 523264
        %v639 = vsel %vm637, %v618, 0
        %641 = vmatprep.subr.mxu0 0.0
        %642 = vmatpush1.msra.mxu0 0.0
        %643 = vmatprep.subr.mxu0 0.0
        %644 = vmatpush1.msra.mxu0 0.0
        %645 = vmatprep.subr.mxu0 0.0
        %646 = vmatpush1.msra.mxu0 0.0
        %647 = vmatprep.subr.mxu0 0.0
        %648 = vmatpush1.msra.mxu0 0.0
        %649 = vmatprep.subr.mxu0 0.0
        %650 = vmatpush1.msra.mxu0 0.0
        %651 = vmatprep.subr.mxu0 0.0
        %652 = vmatpush1.msra.mxu0 0.0
        %653 = vmatprep.subr.mxu0 0.0
        %654 = vmatpush1.msra.mxu0 0.0
        %655 = vmatprep.subr.mxu0 0.0
        %656 = vmatpush1.msra.mxu0 0.0
        %657 = vmatprep.subr.mxu0 %v636
        %658 = vmatpush1.msra.mxu0 %v635
        %659 = vmatprep.subr.mxu0 %v634
        %660 = vmatpush1.msra.mxu0 %v633
        %661 = vmatprep.subr.mxu0 %v632
        %662 = vmatpush1.msra.mxu0 %v631
        %663 = vmatprep.subr.mxu0 %v630
        %664 = vmatpush1.msra.mxu0 %v629
        %665 = vmatprep.subr.mxu0 %v628
        %666 = vmatpush1.msra.mxu0 %v627
        %667 = vmatprep.subr.mxu0 %v626
        %668 = vmatpush1.msra.mxu0 %v625
        %669 = vmatprep.subr.mxu0 %v624
        %670 = vmatpush1.msra.mxu0 %v623
        %671 = vmatprep.subr.mxu0 %v622
        %672 = vmatpush1.msra.mxu0 %v621
        %673 = vmatprep.subr.mxu0 0.0
        %674 = vmatpush2.msra.mxu0 0.0
        %675 = vmatprep.subr.mxu0 0.0
        %676 = vmatpush2.msra.mxu0 0.0
        %677 = vmatprep.subr.mxu0 0.0
        %678 = vmatpush2.msra.mxu0 0.0
        %679 = vmatprep.subr.mxu0 0.0
        %680 = vmatpush2.msra.mxu0 0.0
        %681 = vmatprep.subr.mxu0 0.0
        %682 = vmatpush2.msra.mxu0 0.0
        %683 = vmatprep.subr.mxu0 0.0
        %684 = vmatpush2.msra.mxu0 0.0
        %685 = vmatprep.subr.mxu0 0.0
        %686 = vmatpush2.msra.mxu0 0.0
        %687 = vmatprep.subr.mxu0 0.0
        %688 = vmatpush2.msra.mxu0 0.0
        %689 = vmatprep.subr.mxu0 0.0
        %690 = vmatpush2.msra.mxu0 0.0
        %691 = vmatprep.subr.mxu0 0.0
        %692 = vmatpush2.msra.mxu0 0.0
        %693 = vmatprep.subr.mxu0 0.0
        %694 = vmatpush2.msra.mxu0 0.0
        %695 = vmatprep.subr.mxu0 0.0
        %696 = vmatpush2.msra.mxu0 0.0
        %697 = vmatprep.subr.mxu0 0.0
        %698 = vmatpush2.msra.mxu0 0.0
        %699 = vmatprep.subr.mxu0 0.0
        %700 = vmatpush2.msra.mxu0 0.0
        %701 = vmatprep.subr.mxu0 0.0
        %702 = vmatpush2.msra.mxu0 0.0
        %703 = vmatprep.subr.mxu0 0.0
        %704 = vmatpush2.msra.mxu0 0.0
        %705 = vmatprep.mubr.f32.mxu0 0.0
        %706 = vmatmul.mubr.f32.gmra.mxu0 %v639
        %v707 = vpop.f32.mrf.mxu0
        %v708 = vadd.f32 0.0, %v707
        %v709 = vpop.f32.mrf.mxu0
        %v710 = vadd.f32 0.0, %v709
        %711 = vdwg.mxu0
        %v712 = vld [vmem:[%s458] sm:$0xff]
        %v713 = vld [vmem:[%s458 + $0x8] sm:$0xff]
        %v714 = vld [vmem:[%s467] sm:$0xff]
        %v715 = vld [vmem:[%s467 + $0x8] sm:$0xff]
        %v716 = vadd.f32 %v712, %v714
        %v717 = vadd.f32 %v713, %v715
        %v718 = vld [vmem:[%s537] sm:$0xff]
        %v719 = vld [vmem:[%s537 + $0x8] sm:$0xff]
        %v720 = vadd.f32 %v716, %v718
        %v721 = vadd.f32 %v717, %v719
        %v722 = vld [vmem:[#allocation11] sm:$0xff]
        %v723 = vld [vmem:[%s8] sm:$0xff]
        %725 = vset.pattern.permute.xlu0 0
        %726 = vperm.xlu0 %725, %v723
        %v727 = vpop.permute.xlu0 %726
        %vm729 = vcmask 64512
        %v731 = vsel %vm729, %v722, 0
        %733 = vmatprep.subr.mxu0 0.0
        %734 = vmatpush1.msra.mxu0 0.0
        %735 = vmatprep.subr.mxu0 0.0
        %736 = vmatpush1.msra.mxu0 0.0
        %737 = vmatprep.subr.mxu0 0.0
        %738 = vmatpush1.msra.mxu0 0.0
        %739 = vmatprep.subr.mxu0 0.0
        %740 = vmatpush1.msra.mxu0 0.0
        %741 = vmatprep.subr.mxu0 0.0
        %742 = vmatpush1.msra.mxu0 0.0
        %743 = vmatprep.subr.mxu0 0.0
        %744 = vmatpush1.msra.mxu0 0.0
        %745 = vmatprep.subr.mxu0 0.0
        %746 = vmatpush1.msra.mxu0 0.0
        %747 = vmatprep.subr.mxu0 0.0
        %748 = vmatpush1.msra.mxu0 0.0
        %749 = vmatprep.subr.mxu0 0.0
        %750 = vmatpush1.msra.mxu0 0.0
        %751 = vmatprep.subr.mxu0 0.0
        %752 = vmatpush1.msra.mxu0 0.0
        %753 = vmatprep.subr.mxu0 0.0
        %754 = vmatpush1.msra.mxu0 0.0
        %755 = vmatprep.subr.mxu0 0.0
        %756 = vmatpush1.msra.mxu0 0.0
        %757 = vmatprep.subr.mxu0 0.0
        %758 = vmatpush1.msra.mxu0 0.0
        %759 = vmatprep.subr.mxu0 0.0
        %760 = vmatpush1.msra.mxu0 0.0
        %761 = vmatprep.subr.mxu0 0.0
        %762 = vmatpush1.msra.mxu0 0.0
        %763 = vmatprep.subr.mxu0 %v721
        %764 = vmatpush1.msra.mxu0 %v720
        %765 = vmatprep.subr.mxu0 0.0
        %766 = vmatpush2.msra.mxu0 0.0
        %767 = vmatprep.subr.mxu0 0.0
        %768 = vmatpush2.msra.mxu0 0.0
        %769 = vmatprep.subr.mxu0 0.0
        %770 = vmatpush2.msra.mxu0 0.0
        %771 = vmatprep.subr.mxu0 0.0
        %772 = vmatpush2.msra.mxu0 0.0
        %773 = vmatprep.subr.mxu0 0.0
        %774 = vmatpush2.msra.mxu0 0.0
        %775 = vmatprep.subr.mxu0 0.0
        %776 = vmatpush2.msra.mxu0 0.0
        %777 = vmatprep.subr.mxu0 0.0
        %778 = vmatpush2.msra.mxu0 0.0
        %779 = vmatprep.subr.mxu0 0.0
        %780 = vmatpush2.msra.mxu0 0.0
        %781 = vmatprep.subr.mxu0 0.0
        %782 = vmatpush2.msra.mxu0 0.0
        %783 = vmatprep.subr.mxu0 0.0
        %784 = vmatpush2.msra.mxu0 0.0
        %785 = vmatprep.subr.mxu0 0.0
        %786 = vmatpush2.msra.mxu0 0.0
        %787 = vmatprep.subr.mxu0 0.0
        %788 = vmatpush2.msra.mxu0 0.0
        %789 = vmatprep.subr.mxu0 0.0
        %790 = vmatpush2.msra.mxu0 0.0
        %791 = vmatprep.subr.mxu0 0.0
        %792 = vmatpush2.msra.mxu0 0.0
        %793 = vmatprep.subr.mxu0 0.0
        %794 = vmatpush2.msra.mxu0 0.0
        %795 = vmatprep.subr.mxu0 0.0
        %796 = vmatpush2.msra.mxu0 0.0
        %797 = vmatprep.mubr.f32.mxu0 0.0
        %798 = vmatmul.mubr.f32.gmra.mxu0 %v731
        %v799 = vpop.f32.mrf.mxu0
        %v800 = vadd.f32 %v727, %v799
        %v801 = vpop.f32.mrf.mxu0
        %v802 = vadd.f32 %v727, %v801
        %803 = vdwg.mxu0
        %804 = vmatprep.subr.mxu0 0.0
        %805 = vmatpush1.xpose.msra.mxu0 0.0
        %806 = vmatprep.subr.mxu0 0.0
        %807 = vmatpush1.xpose.msra.mxu0 0.0
        %808 = vmatprep.subr.mxu0 0.0
        %809 = vmatpush1.xpose.msra.mxu0 0.0
        %810 = vmatprep.subr.mxu0 0.0
        %811 = vmatpush1.xpose.msra.mxu0 0.0
        %812 = vmatprep.subr.mxu0 0.0
        %813 = vmatpush1.xpose.msra.mxu0 0.0
        %814 = vmatprep.subr.mxu0 0.0
        %815 = vmatpush1.xpose.msra.mxu0 0.0
        %816 = vmatprep.subr.mxu0 0.0
        %817 = vmatpush1.xpose.msra.mxu0 0.0
        %818 = vmatprep.subr.mxu0 0.0
        %819 = vmatpush1.xpose.msra.mxu0 0.0
        %820 = vmatprep.subr.mxu0 0.0
        %821 = vmatpush1.xpose.msra.mxu0 0.0
        %822 = vmatprep.subr.mxu0 0.0
        %823 = vmatpush1.xpose.msra.mxu0 0.0
        %824 = vmatprep.subr.mxu0 0.0
        %825 = vmatpush1.xpose.msra.mxu0 0.0
        %826 = vmatprep.subr.mxu0 0.0
        %827 = vmatpush1.xpose.msra.mxu0 0.0
        %828 = vmatprep.subr.mxu0 0.0
        %829 = vmatpush1.xpose.msra.mxu0 0.0
        %830 = vmatprep.subr.mxu0 0.0
        %831 = vmatpush1.xpose.msra.mxu0 0.0
        %832 = vmatprep.subr.mxu0 0.0
        %833 = vmatpush1.xpose.msra.mxu0 0.0
        %834 = vmatprep.subr.mxu0 %v802
        %835 = vmatpush1.xpose.msra.mxu0 %v800
        %836 = vmatprep.subr.mxu0 0.0
        %837 = vmatpush2.xpose.msra.mxu0 0.0
        %838 = vmatprep.subr.mxu0 0.0
        %839 = vmatpush2.xpose.msra.mxu0 0.0
        %840 = vmatprep.subr.mxu0 0.0
        %841 = vmatpush2.xpose.msra.mxu0 0.0
        %842 = vmatprep.subr.mxu0 0.0
        %843 = vmatpush2.xpose.msra.mxu0 0.0
        %844 = vmatprep.subr.mxu0 0.0
        %845 = vmatpush2.xpose.msra.mxu0 0.0
        %846 = vmatprep.subr.mxu0 0.0
        %847 = vmatpush2.xpose.msra.mxu0 0.0
        %848 = vmatprep.subr.mxu0 0.0
        %849 = vmatpush2.xpose.msra.mxu0 0.0
        %850 = vmatprep.subr.mxu0 0.0
        %851 = vmatpush2.xpose.msra.mxu0 0.0
        %852 = vmatprep.subr.mxu0 0.0
        %853 = vmatpush2.xpose.msra.mxu0 0.0
        %854 = vmatprep.subr.mxu0 0.0
        %855 = vmatpush2.xpose.msra.mxu0 0.0
        %856 = vmatprep.subr.mxu0 0.0
        %857 = vmatpush2.xpose.msra.mxu0 0.0
        %858 = vmatprep.subr.mxu0 0.0
        %859 = vmatpush2.xpose.msra.mxu0 0.0
        %860 = vmatprep.subr.mxu0 0.0
        %861 = vmatpush2.xpose.msra.mxu0 0.0
        %862 = vmatprep.subr.mxu0 0.0
        %863 = vmatpush2.xpose.msra.mxu0 0.0
        %864 = vmatprep.subr.mxu0 0.0
        %865 = vmatpush2.xpose.msra.mxu0 0.0
        %866 = vmatprep.subr.mxu0 0.0
        %867 = vmatpush2.xpose.msra.mxu0 0.0
        %868 = vmatprep.mubr.f32.mxu0 %v710
        %869 = vmatmul.mubr.f32.gmra.mxu0 %v708
        %v870 = vpop.f32.mrf.mxu0
        %v871 = vadd.f32 0.0, %v870
        %v872 = vpop.f32.mrf.mxu0
        %873 = vdwg.mxu0
        %v874 = vmul.f32 %v871, 0.0625
        %v875 = vsel %vm729, %v874, -inf
        %876 = vmax.xlane.f32.xlu0 %v875
        %v877 = vpop.xlane.xlu0 %876
        %v878 = vrot.slane %v877, 4
        %v879 = vmax.f32 %v877, %v878
        %v880 = vrot.slane %v879, 2
        %v881 = vmax.f32 %v879, %v880
        %v882 = vrot.slane %v881, 1
        %v883 = vmax.f32 %v881, %v882
        %s884 = vtos %v883
        %v885 = vstv %s884
        %v886 = vsub.f32 %v874, %v885
        %v887 = vmul.f32 %v886, 1.442695
        %v888 = vpow.pop %v887
        %v889 = vsel %vm729, %v888, 0.0
        %890 = vadd.xlane.f32.xlu0 %v889
        %v891 = vpop.xlane.xlu0 %890
        %v892 = vrot.slane %v891, 4
        %v893 = vadd.f32 %v891, %v892
        %v894 = vrot.slane %v893, 2
        %v895 = vadd.f32 %v893, %v894
        %v896 = vrot.slane %v895, 1
        %v897 = vadd.f32 %v895, %v896
        %s898 = vtos %v897
        %v899 = vstv %s898
        %v900 = vrcp.pop %v899
        %v901 = vmul.f32 %v888, %v900
        %v902 = vadd.f32 %v708, %v712
        %v903 = vadd.f32 %v710, %v713
        %v904 = vld [vmem:[%s9] sm:$0xff]
        %v906 = vsel %vm729, %v904, 0
        %908 = vmatprep.subr.mxu0 0.0
        %909 = vmatpush1.msra.mxu0 0.0
        %910 = vmatprep.subr.mxu0 0.0
        %911 = vmatpush1.msra.mxu0 0.0
        %912 = vmatprep.subr.mxu0 0.0
        %913 = vmatpush1.msra.mxu0 0.0
        %914 = vmatprep.subr.mxu0 0.0
        %915 = vmatpush1.msra.mxu0 0.0
        %916 = vmatprep.subr.mxu0 0.0
        %917 = vmatpush1.msra.mxu0 0.0
        %918 = vmatprep.subr.mxu0 0.0
        %919 = vmatpush1.msra.mxu0 0.0
        %920 = vmatprep.subr.mxu0 0.0
        %921 = vmatpush1.msra.mxu0 0.0
        %922 = vmatprep.subr.mxu0 0.0
        %923 = vmatpush1.msra.mxu0 0.0
        %924 = vmatprep.subr.mxu0 0.0
        %925 = vmatpush1.msra.mxu0 0.0
        %926 = vmatprep.subr.mxu0 0.0
        %927 = vmatpush1.msra.mxu0 0.0
        %928 = vmatprep.subr.mxu0 0.0
        %929 = vmatpush1.msra.mxu0 0.0
        %930 = vmatprep.subr.mxu0 0.0
        %931 = vmatpush1.msra.mxu0 0.0
        %932 = vmatprep.subr.mxu0 0.0
        %933 = vmatpush1.msra.mxu0 0.0
        %934 = vmatprep.subr.mxu0 0.0
        %935 = vmatpush1.msra.mxu0 0.0
        %936 = vmatprep.subr.mxu0 0.0
        %937 = vmatpush1.msra.mxu0 0.0
        %938 = vmatprep.subr.mxu0 0.0
        %939 = vmatpush1.msra.mxu0 %v901
        %940 = vmatprep.subr.mxu0 0.0
        %941 = vmatpush2.msra.mxu0 0.0
        %942 = vmatprep.subr.mxu0 0.0
        %943 = vmatpush2.msra.mxu0 0.0
        %944 = vmatprep.subr.mxu0 0.0
        %945 = vmatpush2.msra.mxu0 0.0
        %946 = vmatprep.subr.mxu0 0.0
        %947 = vmatpush2.msra.mxu0 0.0
        %948 = vmatprep.subr.mxu0 0.0
        %949 = vmatpush2.msra.mxu0 0.0
        %950 = vmatprep.subr.mxu0 0.0
        %951 = vmatpush2.msra.mxu0 0.0
        %952 = vmatprep.subr.mxu0 0.0
        %953 = vmatpush2.msra.mxu0 0.0
        %954 = vmatprep.subr.mxu0 0.0
        %955 = vmatpush2.msra.mxu0 0.0
        %956 = vmatprep.subr.mxu0 0.0
        %957 = vmatpush2.msra.mxu0 0.0
        %958 = vmatprep.subr.mxu0 0.0
        %959 = vmatpush2.msra.mxu0 0.0
        %960 = vmatprep.subr.mxu0 0.0
        %961 = vmatpush2.msra.mxu0 0.0
        %962 = vmatprep.subr.mxu0 0.0
        %963 = vmatpush2.msra.mxu0 0.0
        %964 = vmatprep.subr.mxu0 0.0
        %965 = vmatpush2.msra.mxu0 0.0
        %966 = vmatprep.subr.mxu0 0.0
        %967 = vmatpush2.msra.mxu0 0.0
        %968 = vmatprep.subr.mxu0 0.0
        %969 = vmatpush2.msra.mxu0 0.0
        %970 = vmatprep.subr.mxu0 0.0
        %971 = vmatpush2.msra.mxu0 0.0
        %972 = vmatprep.mubr.f32.mxu0 0.0
        %973 = vmatmul.mubr.f32.gmra.mxu0 %v906
        %v974 = vpop.f32.mrf.mxu0
        %v975 = vadd.f32 %v904, %v974
        %v976 = vpop.f32.mrf.mxu0
        %977 = vdwg.mxu0
        %v978 = vld [vmem:[%s10] sm:$0xff]
        %980 = vset.pattern.permute.xlu0 0
        %981 = vperm.xlu0 %980, %v978
        %v982 = vpop.permute.xlu0 %981
        %v985 = vsel %vm729, %v975, 0
        %987 = vmatprep.subr.mxu0 0.0
        %988 = vmatpush1.msra.mxu0 0.0
        %989 = vmatprep.subr.mxu0 0.0
        %990 = vmatpush1.msra.mxu0 0.0
        %991 = vmatprep.subr.mxu0 0.0
        %992 = vmatpush1.msra.mxu0 0.0
        %993 = vmatprep.subr.mxu0 0.0
        %994 = vmatpush1.msra.mxu0 0.0
        %995 = vmatprep.subr.mxu0 0.0
        %996 = vmatpush1.msra.mxu0 0.0
        %997 = vmatprep.subr.mxu0 0.0
        %998 = vmatpush1.msra.mxu0 0.0
        %999 = vmatprep.subr.mxu0 0.0
        %1000 = vmatpush1.msra.mxu0 0.0
        %1001 = vmatprep.subr.mxu0 0.0
        %1002 = vmatpush1.msra.mxu0 0.0
        %1003 = vmatprep.subr.mxu0 0.0
        %1004 = vmatpush1.msra.mxu0 0.0
        %1005 = vmatprep.subr.mxu0 0.0
        %1006 = vmatpush1.msra.mxu0 0.0
        %1007 = vmatprep.subr.mxu0 0.0
        %1008 = vmatpush1.msra.mxu0 0.0
        %1009 = vmatprep.subr.mxu0 0.0
        %1010 = vmatpush1.msra.mxu0 0.0
        %1011 = vmatprep.subr.mxu0 0.0
        %1012 = vmatpush1.msra.mxu0 0.0
        %1013 = vmatprep.subr.mxu0 0.0
        %1014 = vmatpush1.msra.mxu0 0.0
        %1015 = vmatprep.subr.mxu0 0.0
        %1016 = vmatpush1.msra.mxu0 0.0
        %1017 = vmatprep.subr.mxu0 %v903
        %1018 = vmatpush1.msra.mxu0 %v902
        %1019 = vmatprep.subr.mxu0 0.0
        %1020 = vmatpush2.msra.mxu0 0.0
        %1021 = vmatprep.subr.mxu0 0.0
        %1022 = vmatpush2.msra.mxu0 0.0
        %1023 = vmatprep.subr.mxu0 0.0
        %1024 = vmatpush2.msra.mxu0 0.0
        %1025 = vmatprep.subr.mxu0 0.0
        %1026 = vmatpush2.msra.mxu0 0.0
        %1027 = vmatprep.subr.mxu0 0.0
        %1028 = vmatpush2.msra.mxu0 0.0
        %1029 = vmatprep.subr.mxu0 0.0
        %1030 = vmatpush2.msra.mxu0 0.0
        %1031 = vmatprep.subr.mxu0 0.0
        %1032 = vmatpush2.msra.mxu0 0.0
        %1033 = vmatprep.subr.mxu0 0.0
        %1034 = vmatpush2.msra.mxu0 0.0
        %1035 = vmatprep.subr.mxu0 0.0
        %1036 = vmatpush2.msra.mxu0 0.0
        %1037 = vmatprep.subr.mxu0 0.0
        %1038 = vmatpush2.msra.mxu0 0.0
        %1039 = vmatprep.subr.mxu0 0.0
        %1040 = vmatpush2.msra.mxu0 0.0
        %1041 = vmatprep.subr.mxu0 0.0
        %1042 = vmatpush2.msra.mxu0 0.0
        %1043 = vmatprep.subr.mxu0 0.0
        %1044 = vmatpush2.msra.mxu0 0.0
        %1045 = vmatprep.subr.mxu0 0.0
        %1046 = vmatpush2.msra.mxu0 0.0
        %1047 = vmatprep.subr.mxu0 0.0
        %1048 = vmatpush2.msra.mxu0 0.0
        %1049 = vmatprep.subr.mxu0 0.0
        %1050 = vmatpush2.msra.mxu0 0.0
        %1051 = vmatprep.mubr.f32.mxu0 0.0
        %1052 = vmatmul.mubr.f32.gmra.mxu0 %v985
        %v1053 = vpop.f32.mrf.mxu0
        %v1054 = vadd.f32 %v982, %v1053
        %v1055 = vpop.f32.mrf.mxu0
        %v1056 = vadd.f32 %v982, %v1055
        %1057 = vdwg.mxu0
        %v1058 = vmax.f32 %v1054, 0.0
        %v1059 = vmax.f32 %v1056, 0.0
        %1060 = vst [vmem:[%s532] sm:$0xff] %v1058
        %1061 = vst [vmem:[%s532 + $0x8] sm:$0xff] %v1059
        %s1062 = sand.u32 %s292, 1
        %s1063 = scalar_lea.sflag [#allocation4], %s1062
        %s1064 = sand.u32 %s292, 1
        %s1065 = smul.addr %s1064, 16
        %s1066 = scalar_lea.vmem [#allocation13], %s1065
        // Predicated region
        $region89: #{tpu_custom_call.1} parent=63 // pred_check
          %p1067 = pneg %p302
        $region90: #{tpu_custom_call.1} parent=63 // pred_check_branch
          %1069 = sbr.rel (%p1067) target = $region92
        $region91: #{tpu_custom_call.1} parent=63 // pred_region
          %s1071 = ssub.s32 256, 256
          %1072 = vsyncadd %s1063, %s1071
          %s1073 = smul.addr %s33, 2
          %s1074 = smul.addr %s1073, 128
          %s1075 = scalar_lea.hbm %s11, %s1074
          %s1077 = sshll.u32 %s1066, 4
          %s1078 = int_to_ptr.vmem [resolvable:$true] %s1077
          %1080 = dma.vmem_to_hbm [thread:$0]  %s1078, 256, %s1075, %s1063
        $region92: #{tpu_custom_call.1} parent=63 // pred_fallthru
          _
      $region64: #{tpu_custom_call.1} parent=5 // pred_fallthru
        _
      %p1081 = scmp.le.s32.totalorder 2, %s28
      // Predicated region
      $region93: #{tpu_custom_call.1} parent=5 // pred_check
        %p1082 = pneg %p1081
      $region94: #{tpu_custom_call.1} parent=5 // pred_check_branch
        %1084 = sbr.rel (%p1082) target = $region96
      $region95: #{tpu_custom_call.1} parent=5 // pred_region
        %s1085 = ssub.s32 %s28, 2
        // Predicated region
        $region97: #{tpu_custom_call.1} parent=95 // pred_check
          %p1086 = pneg %p308
        $region98: #{tpu_custom_call.1} parent=95 // pred_check_branch
          %1088 = sbr.rel (%p1086) target = $region100
        $region99: #{tpu_custom_call.1} parent=95 // pred_region
          %s1089 = sand.u32 %s293, 1
          %s1090 = scalar_lea.sflag [#allocation4], %s1089
          %s1091 = sand.u32 %s293, 1
          %s1092 = smul.addr %s1091, 16
          %s1093 = scalar_lea.vmem [#allocation13], %s1092
          %1094 = dma.done %s1090, 256
        $region100: #{tpu_custom_call.1} parent=95 // pred_fallthru
          _
      $region96: #{tpu_custom_call.1} parent=5 // pred_fallthru
        _
    $region6: #{tpu_custom_call.1} parent=1 // loop_footer
      %s32 = sadd.s32 1, %s28
    $region7: #{tpu_custom_call.1} parent=1 // loop_footer_branch
      %27 = sbr.rel target = $region3
    $region8: #{tpu_custom_call.1} parent=1 // loop_exit
      _
    %1095 = vsyncpa [#allocation3], 1
    %s1096 = scalar_lea.sflag [#allocation3], 1
    %1097 = vsyncpa %s1096, 1
    %1098 = vsyncpa [#allocation6], 1
    %s1099 = scalar_lea.sflag [#allocation6], 1
    %1100 = vsyncpa %s1099, 1
    %1101 = vsyncpa [#allocation9], 1
    %1102 = vsyncpa [#allocation12], 1
    %1103 = vsyncpa [#allocation4], 1
    %s1104 = scalar_lea.sflag [#allocation4], 1
    %1105 = vsyncpa %s1104, 1

</llo_original>
